<compile_context>
chip_gen: v6e
topology: v6e:2x2x1
jax: 0.10.0
libtpu: 0.0.40
codegen_flags: <defaults>
</compile_context>

<pallas_src>
import functools
import math

import jax
import jax.numpy as jnp
import numpy as np
from jax import lax
from jax.experimental import pallas as pl
from jax.experimental.pallas import tpu as pltpu


# ------------------------------ tiling helper --------------------------------

def _pick_tile(n, candidates):
    """Largest candidate tile (128-multiples) dividing n, else the full dim."""
    for c in candidates:
        if n >= c and n % c == 0:
            return c
    # TODO(synk): pad + mask instead of a single full-dim tile for awkward dims.
    return n


# ------------------------------ tiled linear ----------------------------------

def _linear_kernel(x_ref, w_ref, b_ref, o_ref, acc_ref):
    @pl.when(pl.program_id(2) == 0)
    def _():
        acc_ref[...] = jnp.zeros_like(acc_ref)

    acc_ref[...] += jnp.dot(x_ref[...], w_ref[...],
                            preferred_element_type=jnp.float32)

    @pl.when(pl.program_id(2) == pl.num_programs(2) - 1)
    def _():
        o_ref[...] = (acc_ref[...] + b_ref[...].astype(jnp.float32)
                      ).astype(o_ref.dtype)


def linear(x, w, b, out_dtype=None):
    """x[M,K] @ w[K,N] + b[1,N].  x/w are expected pre-cast to bf16."""
    M, K = x.shape
    N = w.shape[1]
    out_dtype = out_dtype or x.dtype
    tm = _pick_tile(M, (512, 256, 128))
    tn = _pick_tile(N, (512, 256, 128))
    tk = _pick_tile(K, (1024, 512, 256, 128))
    grid = (M // tm, N // tn, K // tk)
    cost = pl.CostEstimate(
        flops=2 * M * N * K,
        transcendentals=0,
        bytes_accessed=2 * (M * K + K * N + M * N) + 4 * N,
    )
    return pl.pallas_call(
        _linear_kernel,
        out_shape=jax.ShapeDtypeStruct((M, N), out_dtype),
        grid_spec=pltpu.PrefetchScalarGridSpec(
            num_scalar_prefetch=0,
            grid=grid,
            in_specs=[
                pl.BlockSpec((tm, tk), lambda i, j, k: (i, k)),
                pl.BlockSpec((tk, tn), lambda i, j, k: (k, j)),
                pl.BlockSpec((1, tn), lambda i, j, k: (0, j)),
            ],
            out_specs=pl.BlockSpec((tm, tn), lambda i, j, k: (i, j)),
            scratch_shapes=[pltpu.VMEM((tm, tn), jnp.float32)],
        ),
        compiler_params=pltpu.CompilerParams(
            dimension_semantics=("parallel", "parallel", "arbitrary")),
        cost_estimate=cost,
    )(x, w, b)


# ------------------ QKNorm + interleaved RoPE + head split --------------------

def _roll_lanes(x, shift):
    n = x.shape[-1]
    return pltpu.roll(x, shift % n, axis=x.ndim - 1)


def _group_sum_lanes(x, group):
    """Per-lane sum over the `group` adjacent lanes containing the lane.

    Roll-based segmented reduction + broadcast (XLU/VPU only).  Requires
    x.shape[-1] % group == 0 AND group a power of two (doubling loops).
    """
    lane = lax.broadcasted_iota(jnp.int32, x.shape, x.ndim - 1)
    s = x
    sh = 1
    while sh < group:                       # segmented sum: lane j -> sum x[j:j+sh]
        s = s + _roll_lanes(s, -sh)
        sh *= 2
    s = jnp.where(lane % group == 0, s, 0.0)    # exact group sums at group starts
    sh = 1
    while sh < group:                       # broadcast group sum over the group
        s = s + _roll_lanes(s, sh)
        sh *= 2
    return s


def _qknorm_rope_kernel(qkv_ref, pea_ref, peb_ref, qs_ref, ks_ref,
                        q_out, k_out, v_out, *, num_heads, head_dim):
    H, D = num_heads, head_dim
    dim = H * D
    f32 = jnp.float32

    x = qkv_ref[0]                                  # (tl, 3*dim) bf16, packed
    q = x[:, 0:dim].astype(f32)                     # heads packed on lanes
    k = x[:, dim:2 * dim].astype(f32)
    v = x[:, 2 * dim:3 * dim]

    pea = pea_ref[0].astype(f32)                    # (tl, dim)
    peb = peb_ref[0].astype(f32)
    qs = qs_ref[...].astype(f32)                    # (1, dim)
    ks = ks_ref[...].astype(f32)

    # ---- QKNorm: per-head RMSNorm on the packed [tl, H*D] layout -------------
    def rmsnorm(t, sc):
        ms = _group_sum_lanes(t * t, D) * (1.0 / D)
        return t * lax.rsqrt(ms + 1e-6) * sc

    q = rmsnorm(q, qs)
    k = rmsnorm(k, ks)

    # ---- interleaved RoPE via lane roll + parity select (no MXU) -------------
    # The +-1 rolls wrap across the row boundary; this is safe only because the
    # parity select discards the wrapped lane (D is even, head starts are even).
    lane = lax.broadcasted_iota(jnp.int32, q.shape, 1)
    even = (lane % 2) == 0

    def rope(t):
        t_prev = _roll_lanes(t, 1)                  # t[j-1]
        t_next = _roll_lanes(t, -1)                 # t[j+1]
        te = jnp.where(even, t, t_prev)             # t[2*(j//2)]
        to = jnp.where(even, t_next, t)             # t[2*(j//2)+1]
        return pea * te + peb * to

    # fold softmax scale into q once (cheaper than scaling every score tile)
    q = (rope(q) * (1.0 / math.sqrt(D))).astype(q_out.dtype)
    k = rope(k).astype(k_out.dtype)

    # packed lanes [tl, H*D] -> head-major [H, tl, D] for the flash kernel
    for h in range(H):
        sl = slice(h * D, (h + 1) * D)
        q_out[0, h] = q[:, sl]
        k_out[0, h] = k[:, sl]
        v_out[0, h] = v[:, sl].astype(v_out.dtype)


def qknorm_rope_split(qkv, pea, peb, q_scale, k_scale, num_heads):
    B, L, three_dim = qkv.shape
    dim = three_dim // 3
    D = dim // num_heads
    tl = _pick_tile(L, (256, 128))
    kernel = functools.partial(_qknorm_rope_kernel,
                               num_heads=num_heads, head_dim=D)
    cost = pl.CostEstimate(
        flops=40 * B * L * dim,
        transcendentals=2 * B * L * dim,
        bytes_accessed=2 * (B * L * 3 * dim + 2 * L * dim + 3 * B * L * dim) + 8 * dim,
    )
    out_sd = jax.ShapeDtypeStruct((B, num_heads, L, D), jnp.bfloat16)
    # grid order (seq-tile, batch): pe block index is constant across the inner
    # batch axis, so the batch-invariant pe planes are fetched once per tile.
    return pl.pallas_call(
        kernel,
        out_shape=(out_sd, out_sd, out_sd),
        grid_spec=pltpu.PrefetchScalarGridSpec(
            num_scalar_prefetch=0,
            grid=(L // tl, B),
            in_specs=[
                pl.BlockSpec((1, tl, 3 * dim), lambda i, b: (b, i, 0)),
                pl.BlockSpec((1, tl, dim), lambda i, b: (0, i, 0)),
                pl.BlockSpec((1, tl, dim), lambda i, b: (0, i, 0)),
                pl.BlockSpec((1, dim), lambda i, b: (0, 0)),
                pl.BlockSpec((1, dim), lambda i, b: (0, 0)),
            ],
            out_specs=[
                pl.BlockSpec((1, num_heads, tl, D), lambda i, b: (b, 0, i, 0)),
                pl.BlockSpec((1, num_heads, tl, D), lambda i, b: (b, 0, i, 0)),
                pl.BlockSpec((1, num_heads, tl, D), lambda i, b: (b, 0, i, 0)),
            ],
        ),
        compiler_params=pltpu.CompilerParams(
            dimension_semantics=("parallel", "parallel")),
        cost_estimate=cost,
    )(qkv, pea, peb, q_scale, k_scale)


# --------------------------- flash attention ----------------------------------

def _flash_kernel(q_ref, k_ref, v_ref, o_ref, m_ref, l_ref, acc_ref):
    kv = pl.program_id(3)

    @pl.when(kv == 0)
    def _():
        m_ref[...] = jnp.full(m_ref.shape, -jnp.inf, dtype=m_ref.dtype)
        l_ref[...] = jnp.zeros_like(l_ref)
        acc_ref[...] = jnp.zeros_like(acc_ref)

    q = q_ref[0, 0]                                  # (tq, D) bf16, pre-scaled
    k = k_ref[0, 0]                                  # (tkv, D) bf16
    v = v_ref[0, 0]                                  # (tkv, D) bf16

    # contract last axes of q and k (no k.T materialization)
    s = lax.dot_general(q, k, (((1,), (1,)), ((), ())),
                        preferred_element_type=jnp.float32)       # (tq, tkv)

    m_prev = m_ref[...]
    m_new = jnp.maximum(m_prev, jnp.max(s, axis=-1, keepdims=True))
    alpha = jnp.exp(m_prev - m_new)
    p = jnp.exp(s - m_new)

    l_ref[...] = alpha * l_ref[...] + jnp.sum(p, axis=-1, keepdims=True)
    acc_ref[...] = alpha * acc_ref[...] + lax.dot_general(
        p.astype(jnp.bfloat16), v, (((1,), (0,)), ((), ())),
        preferred_element_type=jnp.float32)                       # (tq, D)
    m_ref[...] = m_new

    @pl.when(kv == pl.num_programs(3) - 1)
    def _():
        # approx reciprocal: ~2^-12 rel err; fine for bf16 outputs
        inv = pl.reciprocal(l_ref[...], approx=True)
        o_ref[0, 0] = (acc_ref[...] * inv).astype(o_ref.dtype)


def flash_attention(q, k, v):
    """q/k/v: [B, H, L, D] bf16, q already scaled by 1/sqrt(D)."""
    B, H, L, D = q.shape
    tq = _pick_tile(L, (256, 128))
    tkv = _pick_tile(L, (512, 256, 128))
    cost = pl.CostEstimate(
        flops=4 * B * H * L * L * D,
        transcendentals=B * H * L * L,
        bytes_accessed=2 * 4 * B * H * L * D,
    )
    return pl.pallas_call(
        _flash_kernel,
        out_shape=jax.ShapeDtypeStruct((B, H, L, D), q.dtype),
        grid_spec=pltpu.PrefetchScalarGridSpec(
            num_scalar_prefetch=0,
            grid=(B, H, L // tq, L // tkv),
            in_specs=[
                pl.BlockSpec((1, 1, tq, D), lambda b, h, qi, kv: (b, h, qi, 0)),
                pl.BlockSpec((1, 1, tkv, D), lambda b, h, qi, kv: (b, h, kv, 0)),
                pl.BlockSpec((1, 1, tkv, D), lambda b, h, qi, kv: (b, h, kv, 0)),
            ],
            out_specs=pl.BlockSpec((1, 1, tq, D),
                                   lambda b, h, qi, kv: (b, h, qi, 0)),
            scratch_shapes=[
                pltpu.VMEM((tq, 1), jnp.float32),    # running max m
                pltpu.VMEM((tq, 1), jnp.float32),    # running sum l
                pltpu.VMEM((tq, D), jnp.float32),    # un-normalized output acc
            ],
        ),
        compiler_params=pltpu.CompilerParams(
            dimension_semantics=("parallel", "parallel", "parallel", "arbitrary"),
            vmem_limit_bytes=48 * 1024 * 1024),      # sized for v7x's 64 MiB VMEM
        cost_estimate=cost,
    )(q, k, v)


# --------------- output projection with in-kernel head merge ------------------

def _proj_merge_kernel(o_ref, w_ref, b_ref, out_ref, acc_ref):
    @pl.when(pl.program_id(3) == 0)
    def _():
        acc_ref[...] = jnp.zeros_like(acc_ref)

    acc_ref[...] += jnp.dot(o_ref[0, 0], w_ref[0],
                            preferred_element_type=jnp.float32)

    @pl.when(pl.program_id(3) == pl.num_programs(3) - 1)
    def _():
        out_ref[0] = (acc_ref[...] + b_ref[...].astype(jnp.float32)
                      ).astype(out_ref.dtype)


def proj_merge_heads(o, w_heads, b, out_dtype):
    """out[b,l,:] = sum_h o[b,h,l,:] @ w_heads[h] + b.

    Folds the 'B H L D -> B L (H D)' rearrange into the contraction, so the
    only HBM store is the lane-dense [B, L, N] result.
    """
    B, H, L, D = o.shape
    N = w_heads.shape[2]
    tm = _pick_tile(L, (256, 128))
    tn = _pick_tile(N, (512, 256, 128))
    cost = pl.CostEstimate(
        flops=2 * B * L * H * D * N,
        transcendentals=0,
        bytes_accessed=2 * (B * H * L * D + H * D * N) + 4 * (B * L * N + N),
    )
    return pl.pallas_call(
        _proj_merge_kernel,
        out_shape=jax.ShapeDtypeStruct((B, L, N), out_dtype),
        grid_spec=pltpu.PrefetchScalarGridSpec(
            num_scalar_prefetch=0,
            grid=(B, L // tm, N // tn, H),
            in_specs=[
                pl.BlockSpec((1, 1, tm, D), lambda b, i, j, h: (b, h, i, 0)),
                pl.BlockSpec((1, D, tn), lambda b, i, j, h: (h, 0, j)),
                pl.BlockSpec((1, tn), lambda b, i, j, h: (0, j)),
            ],
            out_specs=pl.BlockSpec((1, tm, tn), lambda b, i, j, h: (b, i, j)),
            scratch_shapes=[pltpu.VMEM((tm, tn), jnp.float32)],
        ),
        compiler_params=pltpu.CompilerParams(
            dimension_semantics=("parallel", "parallel", "parallel", "arbitrary")),
        cost_estimate=cost,
    )(o, w_heads, b)


# ------------------------------ module wrapper --------------------------------

def init_params(key, dim, num_heads):
    D = dim // num_heads
    k1, k2, k3 = jax.random.split(key, 3)
    lim = 1.0 / math.sqrt(dim)
    return {
        # stored as (in, out) so kernels compute a plain x @ W + b
        "w_qkv": jax.random.uniform(k1, (dim, 3 * dim), jnp.float32, -lim, lim),
        "b_qkv": jnp.zeros((1, 3 * dim), jnp.float32),   # qkv_bias=False
        "w_proj": jax.random.uniform(k2, (dim, dim), jnp.float32, -lim, lim),
        "b_proj": jax.random.uniform(k3, (1, dim), jnp.float32, -lim, lim),
        "q_scale": jnp.ones((1, D), jnp.float32),        # QKNorm RMSNorm scales
        "k_scale": jnp.ones((1, D), jnp.float32),
    }


def make_pe(B, L, D, theta=10000.0):
    """Flux rope(pos, dim, theta) -> [B, 1, L, D//2, 2, 2]."""
    pos = jnp.broadcast_to(jnp.arange(L, dtype=jnp.float32), (B, L))
    frac = jnp.arange(0, D, 2, dtype=jnp.float32) / D
    omega = 1.0 / (theta ** frac)
    out = pos[..., None] * omega                         # [B, L, D//2]
    pe = jnp.stack([jnp.cos(out), -jnp.sin(out), jnp.sin(out), jnp.cos(out)], -1)
    return pe.reshape(B, L, D // 2, 2, 2)[:, None]       # [B, 1, L, D//2, 2, 2]


def self_attention_forward(x, pe, params, num_heads):
    B, L, dim = x.shape
    H = num_heads
    D = dim // H
    # power-of-two, even head_dim required by the roll-based segmented RMSNorm
    # and the RoPE lane-parity trick
    assert D % 2 == 0 and (D & (D - 1)) == 0, "head_dim must be an even power of 2"

    # bf16 streams for all large operands (matmuls accumulate in f32 in-kernel)
    x_bf = x.astype(jnp.bfloat16)
    w_qkv = params["w_qkv"].astype(jnp.bfloat16)
    w_proj = params["w_proj"].astype(jnp.bfloat16).reshape(H, D, dim)  # head-major K

    # qkv = self.qkv(x) -- packed bf16 activation [B, L, 3*dim]
    qkv = linear(x_bf.reshape(B * L, dim), w_qkv, params["b_qkv"],
                 out_dtype=jnp.bfloat16).reshape(B, L, 3 * dim)

    # flux pe -> two elementwise multiplier planes tiled across heads so they
    # line up with the packed [L, H*D] lane layout.  pe is batch-invariant, so
    # only one [1, L, dim] bf16 plane is passed (index_map pins batch to 0).
    pea = jnp.tile(pe[0:1, 0, :, :, :, 0].reshape(1, L, D), (1, 1, H)).astype(jnp.bfloat16)
    peb = jnp.tile(pe[0:1, 0, :, :, :, 1].reshape(1, L, D), (1, 1, H)).astype(jnp.bfloat16)
    qs = jnp.tile(params["q_scale"], (1, H))
    ks = jnp.tile(params["k_scale"], (1, H))

    # QKNorm + RoPE + head split -> q, k, v [B, H, L, D] bf16 (q pre-scaled)
    q, k, v = qknorm_rope_split(qkv, pea, peb, qs, ks, num_heads)

    # flash attention with online softmax over KV tiles
    o = flash_attention(q, k, v)                          # [B, H, L, D] bf16

    # x = self.proj(x), with the head merge folded into the contraction
    return proj_merge_heads(o, w_proj, params["b_proj"], out_dtype=x.dtype)


# --------------------------- pure-JAX reference --------------------------------

def reference_forward(x, pe, params, num_heads):
    B, L, dim = x.shape
    D = dim // num_heads
    qkv = x @ params["w_qkv"] + params["b_qkv"][0]
    qkv = qkv.reshape(B, L, 3, num_heads, D)
    q = jnp.transpose(qkv[:, :, 0], (0, 2, 1, 3))
    k = jnp.transpose(qkv[:, :, 1], (0, 2, 1, 3))
    v = jnp.transpose(qkv[:, :, 2], (0, 2, 1, 3))

    def rmsnorm(t, sc):
        rrms = jax.lax.rsqrt(jnp.mean(t * t, axis=-1, keepdims=True) + 1e-6)
        return t * rrms * sc[0]

    q = rmsnorm(q, params["q_scale"])
    k = rmsnorm(k, params["k_scale"])

    def rope(t):
        t_ = t.reshape(B, num_heads, L, D // 2, 1, 2)
        out = pe[..., 0] * t_[..., 0] + pe[..., 1] * t_[..., 1]
        return out.reshape(B, num_heads, L, D)

    q, k = rope(q), rope(k)
    s = jnp.einsum("bhqd,bhkd->bhqk", q, k) / math.sqrt(D)
    p = jax.nn.softmax(s, axis=-1)
    o = jnp.einsum("bhqk,bhkd->bhqd", p, v)
    o = jnp.transpose(o, (0, 2, 1, 3)).reshape(B, L, dim)
    return o @ params["w_proj"] + params["b_proj"][0]


# ----------------------------------- main --------------------------------------

if __name__ == "__main__":
    B, L, dim, num_heads = 2, 128, 128, 8
    D = dim // num_heads

    key = jax.random.PRNGKey(0)
    kx, kp = jax.random.split(key)
    x = jax.random.normal(kx, (B, L, dim), dtype=jnp.float32)
    pe = make_pe(B, L, D)
    params = init_params(kp, dim, num_heads)

    out = jax.block_until_ready(self_attention_forward(x, pe, params, num_heads))
    ref = jax.block_until_ready(reference_forward(x, pe, params, num_heads))

    assert out.shape == (B, L, dim)
    # end-to-end bf16 streams (x, weights, activations) with f32 accumulation
    # and approx-reciprocal softmax normalization -> loosened tolerance
    np.testing.assert_allclose(np.asarray(out), np.asarray(ref),
                               rtol=5e-2, atol=5e-2)
    print("KERNEL_OK")
</pallas_src>

<mosaic_0001>
module attributes {stable_mosaic.version = 11 : i64} {
  func.func @_linear_kernel(%arg0: i32, %arg1: i32, %arg2: i32, %arg3: memref<256x128xbf16, #tpu.memory_space<vmem>>, %arg4: memref<128x128xbf16, #tpu.memory_space<vmem>>, %arg5: memref<1x128xf32, #tpu.memory_space<vmem>>, %arg6: memref<256x128xbf16, #tpu.memory_space<vmem>>, %arg7: memref<256x128xf32, #tpu.memory_space<vmem>>) attributes {dimension_semantics = [#tpu.dimension_semantics<parallel>, #tpu.dimension_semantics<parallel>, #tpu.dimension_semantics<arbitrary>], iteration_bounds = array<i64: 1, 3, 1>, scalar_prefetch = 0 : i64, scratch_operands = 1 : i64, tpu.core_type = #tpu.core_type<tc>, window_params = [{transform_indices = @transform_0, window_bounds = array<i64: 256, 128>}, {transform_indices = @transform_1, window_bounds = array<i64: 128, 128>}, {transform_indices = @transform_2, window_bounds = array<i64: 1, 128>}, {transform_indices = @transform_3, window_bounds = array<i64: 256, 128>}]} {
    %c0_i32 = arith.constant 0 : i32
    %0 = arith.cmpi eq, %arg2, %c0_i32 : i32
    %1 = arith.extui %0 : i1 to i32
    %c0_i32_0 = arith.constant 0 : i32
    %2 = arith.cmpi ne, %1, %c0_i32_0 : i32
    scf.if %2 {
      %cst_10 = arith.constant 0.000000e+00 : f32
      %12 = vector.broadcast %cst_10 : f32 to vector<256x128xf32>
      %c0_11 = arith.constant 0 : index
      %c0_12 = arith.constant 0 : index
      %13 = vector.load %arg7[%c0_11, %c0_12] : memref<256x128xf32, #tpu.memory_space<vmem>>, vector<256x128xf32>
      tpu.vector_store %arg7[%c0_11, %c0_12], %12 {strides = array<i32>} : memref<256x128xf32, #tpu.memory_space<vmem>>, vector<256x128xf32>,
    } else {
    }
    %c0 = arith.constant 0 : index
    %c0_1 = arith.constant 0 : index
    %3 = vector.load %arg7[%c0, %c0_1] : memref<256x128xf32, #tpu.memory_space<vmem>>, vector<256x128xf32>
    %c0_2 = arith.constant 0 : index
    %c0_3 = arith.constant 0 : index
    %4 = vector.load %arg3[%c0_2, %c0_3] : memref<256x128xbf16, #tpu.memory_space<vmem>>, vector<256x128xbf16>
    %c0_4 = arith.constant 0 : index
    %c0_5 = arith.constant 0 : index
    %5 = vector.load %arg4[%c0_4, %c0_5] : memref<128x128xbf16, #tpu.memory_space<vmem>>, vector<128x128xbf16>
    %cst = arith.constant dense<0.000000e+00> : vector<256x128xf32>
    %6 = tpu.matmul %4, %5, %cst {dimension_numbers = #tpu.dot_dimension_numbers<[1], [0], [0], [1], [0, 0, 1, 1], [], []>} : vector<256x128xbf16>, vector<128x128xbf16>, vector<256x128xf32> -> vector<256x128xf32>
    %7 = arith.addf %3, %6 : vector<256x128xf32>
    %c0_6 = arith.constant 0 : index
    %c0_7 = arith.constant 0 : index
    %8 = vector.load %arg7[%c0_6, %c0_7] : memref<256x128xf32, #tpu.memory_space<vmem>>, vector<256x128xf32>
    tpu.vector_store %arg7[%c0_6, %c0_7], %7 {strides = array<i32>} : memref<256x128xf32, #tpu.memory_space<vmem>>, vector<256x128xf32>,
    %c0_i32_8 = arith.constant 0 : i32
    %9 = arith.cmpi eq, %arg2, %c0_i32_8 : i32
    %10 = arith.extui %9 : i1 to i32
    %c0_i32_9 = arith.constant 0 : i32
    %11 = arith.cmpi ne, %10, %c0_i32_9 : i32
    scf.if %11 {
      %c0_10 = arith.constant 0 : index
      %c0_11 = arith.constant 0 : index
      %12 = vector.load %arg7[%c0_10, %c0_11] : memref<256x128xf32, #tpu.memory_space<vmem>>, vector<256x128xf32>
      %c0_12 = arith.constant 0 : index
      %c0_13 = arith.constant 0 : index
      %13 = vector.load %arg5[%c0_12, %c0_13] : memref<1x128xf32, #tpu.memory_space<vmem>>, vector<1x128xf32>
      %14 = vector.broadcast %13 : vector<1x128xf32> to vector<256x128xf32>
      %15 = arith.addf %12, %14 : vector<256x128xf32>
      %16 = arith.truncf %15 : vector<256x128xf32> to vector<256x128xbf16>
      %c0_14 = arith.constant 0 : index
      %c0_15 = arith.constant 0 : index
      %17 = vector.load %arg6[%c0_14, %c0_15] : memref<256x128xbf16, #tpu.memory_space<vmem>>, vector<256x128xbf16>
      tpu.vector_store %arg6[%c0_14, %c0_15], %16 {strides = array<i32>} : memref<256x128xbf16, #tpu.memory_space<vmem>>, vector<256x128xbf16>,
    } else {
    }
    return
  }
  func.func @transform_0(%arg0: i32, %arg1: i32, %arg2: i32) -> (i32, i32) {
    %c0_i32 = arith.constant 0 : i32
    return %arg0, %arg2 : i32, i32
  }
  func.func @transform_1(%arg0: i32, %arg1: i32, %arg2: i32) -> (i32, i32) {
    %c0_i32 = arith.constant 0 : i32
    return %arg2, %arg1 : i32, i32
  }
  func.func @transform_2(%arg0: i32, %arg1: i32, %arg2: i32) -> (i32, i32) {
    %c0_i32 = arith.constant 0 : i32
    %c0_i32_0 = arith.constant 0 : i32
    return %c0_i32, %arg1 : i32, i32
  }
  func.func @transform_3(%arg0: i32, %arg1: i32, %arg2: i32) -> (i32, i32) {
    %c0_i32 = arith.constant 0 : i32
    return %arg0, %arg1 : i32, i32
  }
}

</mosaic_0001>

<llo_original>
// kernel: tpu_custom_call.1
$region0: #{tpu_custom_call.1}
  #allocation0 [shape = 'u32[]', space=smem, size = 0x4, offset = 0x4, fixed_abs, tag = 'smem constant byte address 0x4 - core index']
  #allocation1 [shape = 'u32[144,128]{1,0:T(1,128)}', space=vmem, size = 0x12000, scoped, tag = 'internal scratch']
  #allocation2 [shape = 'f32[256,128]{1,0:T(8,128)}', space=vmem, size = 0x20000, scoped, tag = 'scratch operand']
  %s0 = inlined_call_operand.hbm [shape: bf16[256,128], index: 0, kind: input, shape index: {}]
  %s1 = inlined_call_operand.hbm [shape: bf16[128,384], index: 1, kind: input, shape index: {}]
  %s2 = inlined_call_operand.vmem [shape: f32[1,384], index: 2, kind: input, shape index: {}]
  %s3 = inlined_call_operand.hbm [shape: bf16[256,384], index: 3, kind: output, shape index: {}]
  %s4 = sld [smem:[#allocation0]]
  $region61: #{tpu_custom_call.1} parent=0
    _
  %s6 = ssub.s32 1, %s4
  %s7 = scalar_select 0, %s6, %s4
  $region1: #{tpu_custom_call.1} parent=0
    #allocation3 [shape = 'u8[65536]{0}', space=vmem, size = 0x10000, scoped, tag = 'input window, operand 0, single buffered']
    #allocation4 [shape = 's32[2]{0}', space=sflag, size = 0x8, scoped, tag = 'scoped memory for tpu_custom_call.1']
    #allocation5 [shape = 's32[2]{0}', space=sflag, size = 0x8, scoped, tag = 'scoped memory for tpu_custom_call.1']
    #allocation6 [shape = 'u8[65536]{0}', space=vmem, size = 0x10000, scoped, tag = 'input window, operand 1']
    #allocation7 [shape = 's32[2]{0}', space=sflag, size = 0x8, scoped, tag = 'scoped memory for tpu_custom_call.1']
    #allocation8 [shape = 'u8[131072]{0}', space=vmem, size = 0x20000, scoped, tag = 'output window, operand 0']
    %8 = vsyncpa [#allocation4], 0
    %9 = vsyncpa [#allocation7], 0
    %s10 = scalar_lea.sflag [#allocation7], 1
    %11 = vsyncpa %s10, 0
    %12 = vsyncpa [#allocation5], 0
    %s13 = scalar_lea.sflag [#allocation5], 1
    %14 = vsyncpa %s13, 0
    loop: start=0, step=1, limit=5
    $region2: #{tpu_custom_call.1} parent=1 // loop_pre_header
      _
    $region3: #{tpu_custom_call.1} parent=1 // loop_header
      %s16 = sphi 0, %s20
      %p17 = scmp.ge.s32.totalorder %s16, 5
      %s23 = sphi 0, %s42
      %s24 = sphi 0, %s38
      %s25 = sphi 0, %s34
      %s26 = sphi 0, %s23
      %s27 = sphi 0, %s24
      %s28 = sphi 0, %s25
      %s29 = sphi 0, %s26
      %s30 = sphi 0, %s27
      %s31 = sphi 0, %s28
      %s47 = sphi 0, %s49
      %s50 = sphi 0, %s47
      %s51 = sphi 0, %s50
      %s67 = sphi 0, %s51
      %s75 = sphi 0, %s77
      %s78 = sphi 0, %s75
      %s79 = sphi 0, %s78
      %s95 = sphi 0, %s79
      %s101 = sphi 0, %s103
      %s104 = sphi 0, %s101
      %s105 = sphi 0, %s104
      %s121 = sphi 0, %s105
      %s129 = sphi 0, %s131
      %s132 = sphi 0, %s129
      %s133 = sphi 0, %s132
      %s149 = sphi 0, %s133
    $region4: #{tpu_custom_call.1} parent=1 // loop_header_branch
      %19 = sbr.rel (%p17) target = $region8
    $region5: #{tpu_custom_call.1} parent=1 // loop_body
      %s21 = ssub.s32 %s16, 1
      %s22 = ssub.s32 %s16, 2
      %s32 = sadd.s32 1, %s25
      %p33 = scmp.ge.s32.totalorder %s32, 1
      %s34 = scalar_select %p33, 0, %s32
      %s35 = sadd.s32 1, %s24
      %s36 = scalar_select %p33, %s35, %s24
      %p37 = scmp.ge.s32.totalorder %s36, 3
      %s38 = scalar_select %p37, 0, %s36
      %s39 = sadd.s32 1, %s23
      %s40 = scalar_select %p37, %s39, %s23
      %p41 = scmp.ge.s32.totalorder %s40, 1
      %s42 = scalar_select %p41, 0, %s40
      %s43 = ssub.s32 %s23, %s42
      %s44 = ssub.s32 %s25, %s34
      %s45 = sor.u32 %s43, %s44
      %p46 = scmp.eq.s32.totalorder %s45, 0
      %s48 = sadd.s32 %s47, 1
      %s49 = scalar_select %p46, %s47, %s48
      %p52 = pneg %p46
      %p53 = scmp.eq.s32.totalorder %s16, 2
      %p54 = por %p52, %p53
      %p55 = scmp.ne.s32.totalorder %s47, %s50
      %p56 = scmp.eq.s32.totalorder %s16, 0
      %p57 = por %p55, %p56
      %p58 = scmp.ne.s32.totalorder %s47, %s50
      %p59 = scmp.eq.s32.totalorder %s21, 2
      %p60 = por %p58, %p59
      %p61 = scmp.ne.s32.totalorder %s50, %s51
      %p62 = scmp.eq.s32.totalorder %s21, 0
      %p63 = por %p61, %p62
      %p64 = scmp.ne.s32.totalorder %s50, %s51
      %p65 = scmp.eq.s32.totalorder %s22, 2
      %p66 = por %p64, %p65
      %p68 = scmp.ne.s32.totalorder %s51, %s67
      %p69 = scmp.eq.s32.totalorder %s22, 0
      %p70 = por %p68, %p69
      %s71 = ssub.s32 %s25, %s34
      %s72 = ssub.s32 %s24, %s38
      %s73 = sor.u32 %s71, %s72
      %p74 = scmp.eq.s32.totalorder %s73, 0
      %s76 = sadd.s32 %s75, 1
      %s77 = scalar_select %p74, %s75, %s76
      %p80 = pneg %p74
      %p81 = scmp.eq.s32.totalorder %s16, 2
      %p82 = por %p80, %p81
      %p83 = scmp.ne.s32.totalorder %s75, %s78
      %p84 = scmp.eq.s32.totalorder %s16, 0
      %p85 = por %p83, %p84
      %p86 = scmp.ne.s32.totalorder %s75, %s78
      %p87 = scmp.eq.s32.totalorder %s21, 2
      %p88 = por %p86, %p87
      %p89 = scmp.ne.s32.totalorder %s78, %s79
      %p90 = scmp.eq.s32.totalorder %s21, 0
      %p91 = por %p89, %p90
      %p92 = scmp.ne.s32.totalorder %s78, %s79
      %p93 = scmp.eq.s32.totalorder %s22, 2
      %p94 = por %p92, %p93
      %p96 = scmp.ne.s32.totalorder %s79, %s95
      %p97 = scmp.eq.s32.totalorder %s22, 0
      %p98 = por %p96, %p97
      %s99 = ssub.s32 %s24, %s38
      %p100 = scmp.eq.s32.totalorder %s99, 0
      %s102 = sadd.s32 %s101, 1
      %s103 = scalar_select %p100, %s101, %s102
      %p106 = pneg %p100
      %p107 = scmp.eq.s32.totalorder %s16, 2
      %p108 = por %p106, %p107
      %p109 = scmp.ne.s32.totalorder %s101, %s104
      %p110 = scmp.eq.s32.totalorder %s16, 0
      %p111 = por %p109, %p110
      %p112 = scmp.ne.s32.totalorder %s101, %s104
      %p113 = scmp.eq.s32.totalorder %s21, 2
      %p114 = por %p112, %p113
      %p115 = scmp.ne.s32.totalorder %s104, %s105
      %p116 = scmp.eq.s32.totalorder %s21, 0
      %p117 = por %p115, %p116
      %p118 = scmp.ne.s32.totalorder %s104, %s105
      %p119 = scmp.eq.s32.totalorder %s22, 2
      %p120 = por %p118, %p119
      %p122 = scmp.ne.s32.totalorder %s105, %s121
      %p123 = scmp.eq.s32.totalorder %s22, 0
      %p124 = por %p122, %p123
      %s125 = ssub.s32 %s23, %s42
      %s126 = ssub.s32 %s24, %s38
      %s127 = sor.u32 %s125, %s126
      %p128 = scmp.eq.s32.totalorder %s127, 0
      %s130 = sadd.s32 %s129, 1
      %s131 = scalar_select %p128, %s129, %s130
      %p134 = pneg %p128
      %p135 = scmp.eq.s32.totalorder %s16, 2
      %p136 = por %p134, %p135
      %p137 = scmp.ne.s32.totalorder %s129, %s132
      %p138 = scmp.eq.s32.totalorder %s16, 0
      %p139 = por %p137, %p138
      %p140 = scmp.ne.s32.totalorder %s129, %s132
      %p141 = scmp.eq.s32.totalorder %s21, 2
      %p142 = por %p140, %p141
      %p143 = scmp.ne.s32.totalorder %s132, %s133
      %p144 = scmp.eq.s32.totalorder %s21, 0
      %p145 = por %p143, %p144
      %p146 = scmp.ne.s32.totalorder %s132, %s133
      %p147 = scmp.eq.s32.totalorder %s22, 2
      %p148 = por %p146, %p147
      %p150 = scmp.ne.s32.totalorder %s133, %s149
      %p151 = scmp.eq.s32.totalorder %s22, 0
      %p152 = por %p150, %p151
      %p153 = scmp.le.s32.totalorder 1, %s16
      %p154 = scmp.lt.s32.totalorder %s16, 4
      %p155 = pnand %p153, %p154
      %p156 = pneg %p155
      // Predicated region
      $region9: #{tpu_custom_call.1} parent=5 // pred_check
        _
      $region10: #{tpu_custom_call.1} parent=5 // pred_check_branch
        %158 = sbr.rel (%p155) target = $region12
      $region11: #{tpu_custom_call.1} parent=5 // pred_region
        %s159 = ssub.s32 %s16, 1
        // Predicated region
        $region13: #{tpu_custom_call.1} parent=11 // pred_check
          %p160 = pneg %p63
        $region14: #{tpu_custom_call.1} parent=11 // pred_check_branch
          %162 = sbr.rel (%p160) target = $region16
        $region15: #{tpu_custom_call.1} parent=11 // pred_region
          %s163 = smul.u32 32, %s26
          %s165 = ssub.s32 2048, 2048
          %166 = vsyncadd [#allocation4], %s165
          %s167 = sadd.s32 %s28, %s163
          %s168 = smul.addr %s167, 64
          %s169 = scalar_lea.hbm %s0, %s168
          %s170 = sshll.u32 [#allocation3], 4
          %s171 = int_to_ptr.vmem [resolvable:$true] %s170
          %176 = dma.hbm_to_vmem [thread:$0]  %s169, 2048, %s171, [#allocation4], 64, 64, 4
        $region16: #{tpu_custom_call.1} parent=11 // pred_fallthru
          _
      $region12: #{tpu_custom_call.1} parent=5 // pred_fallthru
        _
      %p177 = scmp.lt.s32.totalorder %s16, 3
      // Predicated region
      $region17: #{tpu_custom_call.1} parent=5 // pred_check
        %p178 = pneg %p177
      $region18: #{tpu_custom_call.1} parent=5 // pred_check_branch
        %180 = sbr.rel (%p178) target = $region20
      $region19: #{tpu_custom_call.1} parent=5 // pred_region
        // Predicated region
        $region21: #{tpu_custom_call.1} parent=19 // pred_check
          %p181 = pneg %p85
        $region22: #{tpu_custom_call.1} parent=19 // pred_check_branch
          %183 = sbr.rel (%p181) target = $region24
        $region23: #{tpu_custom_call.1} parent=19 // pred_region
          %s184 = sand.u32 %s75, 1
          %s185 = scalar_lea.sflag [#allocation7], %s184
          %s186 = sand.u32 %s75, 1
          %s187 = smul.addr %s186, 64
          %s188 = scalar_lea.vmem [#allocation6], %s187
          %s189 = smul.u32 16, %s25
          %s191 = ssub.s32 1024, 1024
          %192 = vsyncadd %s185, %s191
          %s193 = smul.addr %s189, 3
          %s194 = sadd.s32 %s24, %s193
          %s195 = smul.addr %s194, 64
          %s196 = scalar_lea.hbm %s1, %s195
          %s197 = sshll.u32 %s188, 4
          %s198 = int_to_ptr.vmem [resolvable:$true] %s197
          %203 = dma.hbm_to_vmem [thread:$0]  %s196, 1024, %s198, %s185, 192, 64, 4
        $region24: #{tpu_custom_call.1} parent=19 // pred_fallthru
          _
        // Predicated region
        $region25: #{tpu_custom_call.1} parent=19 // pred_check
          %p204 = pneg %p111
        $region26: #{tpu_custom_call.1} parent=19 // pred_check_branch
          %206 = sbr.rel (%p204) target = $region28
        $region27: #{tpu_custom_call.1} parent=19 // pred_region
          %p207 = scmp.lt.s32.totalorder %s24, 2
          %s208 = scalar_select %p207, %s24, 2
          %s209 = scalar_lea.vmem %s2, %s208
        $region28: #{tpu_custom_call.1} parent=19 // pred_fallthru
          _
      $region20: #{tpu_custom_call.1} parent=5 // pred_fallthru
        _
      %p210 = scmp.le.s32.totalorder 1, %s16
      %p211 = scmp.lt.s32.totalorder %s16, 4
      %p212 = pnand %p210, %p211
      %p213 = pneg %p212
      // Predicated region
      $region29: #{tpu_custom_call.1} parent=5 // pred_check
        _
      $region30: #{tpu_custom_call.1} parent=5 // pred_check_branch
        %215 = sbr.rel (%p212) target = $region32
      $region31: #{tpu_custom_call.1} parent=5 // pred_region
        %s216 = ssub.s32 %s16, 1
        // Predicated region
        $region33: #{tpu_custom_call.1} parent=31 // pred_check
          %p217 = pneg %p63
        $region34: #{tpu_custom_call.1} parent=31 // pred_check_branch
          %219 = sbr.rel (%p217) target = $region36
        $region35: #{tpu_custom_call.1} parent=31 // pred_region
          %220 = dma.done [#allocation4], 2048
        $region36: #{tpu_custom_call.1} parent=31 // pred_fallthru
          _
        %s221 = sand.u32 %s78, 1
        %s222 = scalar_lea.sflag [#allocation7], %s221
        %s223 = sand.u32 %s78, 1
        %s224 = smul.addr %s223, 64
        %s225 = scalar_lea.vmem [#allocation6], %s224
        // Predicated region
        $region37: #{tpu_custom_call.1} parent=31 // pred_check
          %p226 = pneg %p91
        $region38: #{tpu_custom_call.1} parent=31 // pred_check_branch
          %228 = sbr.rel (%p226) target = $region40
        $region39: #{tpu_custom_call.1} parent=31 // pred_region
          %229 = dma.done %s222, 1024
        $region40: #{tpu_custom_call.1} parent=31 // pred_fallthru
          _
        %p230 = pneg %p63
        %p231 = pneg %p60
        %s232 = sand.u32 %s78, 1
        %s233 = scalar_lea.sflag [#allocation7], %s232
        %s234 = sand.u32 %s78, 1
        %s235 = smul.addr %s234, 64
        %s236 = scalar_lea.vmem [#allocation6], %s235
        %p237 = pneg %p91
        %p238 = pneg %p88
        %p239 = scmp.lt.s32.totalorder %s27, 2
        %s240 = scalar_select %p239, %s27, 2
        %s241 = scalar_lea.vmem %s2, %s240
        %p242 = pneg %p117
        %p243 = pneg %p114
        %p244 = pneg %p145
        %p245 = pneg %p142
        %s246 = sand.u32 %s132, 1
        %s247 = scalar_lea.sflag [#allocation5], %s246
        %s248 = sand.u32 %s132, 1
        %s249 = smul.addr %s248, 128
        %s250 = scalar_lea.vmem [#allocation8], %s249
        %s251 = smul.u32 32, %s26
        %s252 = smul.u32 16, %s28
        %p253 = scmp.lt.s32.totalorder %s27, 2
        %s254 = scalar_select %p253, %s27, 2
        %s255 = scalar_lea.vmem %s2, %s254
        %s256 = smul.u32 32, %s26
        %p258 = scmp.eq.s32.totalorder %s28, 0
        // Predicated region
        $region41: #{tpu_custom_call.1} parent=31 // pred_check
          %p259 = pneg %p258
        $region42: #{tpu_custom_call.1} parent=31 // pred_check_branch
          %261 = sbr.rel (%p259) target = $region44
        $region43: #{tpu_custom_call.1} parent=31 // pred_region
          %262 = vst [vmem:[#allocation2] sm:$0xff] 0.0
          %263 = vst [vmem:[#allocation2 + $0x8] sm:$0xff] 0.0
          %264 = vst [vmem:[#allocation2 + $0x10] sm:$0xff] 0.0
          %265 = vst [vmem:[#allocation2 + $0x18] sm:$0xff] 0.0
          %266 = vst [vmem:[#allocation2 + $0x20] sm:$0xff] 0.0
          %267 = vst [vmem:[#allocation2 + $0x28] sm:$0xff] 0.0
          %268 = vst [vmem:[#allocation2 + $0x30] sm:$0xff] 0.0
          %269 = vst [vmem:[#allocation2 + $0x38] sm:$0xff] 0.0
          %270 = vst [vmem:[#allocation2 + $0x40] sm:$0xff] 0.0
          %271 = vst [vmem:[#allocation2 + $0x48] sm:$0xff] 0.0
          %272 = vst [vmem:[#allocation2 + $0x50] sm:$0xff] 0.0
          %273 = vst [vmem:[#allocation2 + $0x58] sm:$0xff] 0.0
          %274 = vst [vmem:[#allocation2 + $0x60] sm:$0xff] 0.0
          %275 = vst [vmem:[#allocation2 + $0x68] sm:$0xff] 0.0
          %276 = vst [vmem:[#allocation2 + $0x70] sm:$0xff] 0.0
          %277 = vst [vmem:[#allocation2 + $0x78] sm:$0xff] 0.0
          %278 = vst [vmem:[#allocation2 + $0x80] sm:$0xff] 0.0
          %279 = vst [vmem:[#allocation2 + $0x88] sm:$0xff] 0.0
          %280 = vst [vmem:[#allocation2 + $0x90] sm:$0xff] 0.0
          %281 = vst [vmem:[#allocation2 + $0x98] sm:$0xff] 0.0
          %282 = vst [vmem:[#allocation2 + $0xa0] sm:$0xff] 0.0
          %283 = vst [vmem:[#allocation2 + $0xa8] sm:$0xff] 0.0
          %284 = vst [vmem:[#allocation2 + $0xb0] sm:$0xff] 0.0
          %285 = vst [vmem:[#allocation2 + $0xb8] sm:$0xff] 0.0
          %286 = vst [vmem:[#allocation2 + $0xc0] sm:$0xff] 0.0
          %287 = vst [vmem:[#allocation2 + $0xc8] sm:$0xff] 0.0
          %288 = vst [vmem:[#allocation2 + $0xd0] sm:$0xff] 0.0
          %289 = vst [vmem:[#allocation2 + $0xd8] sm:$0xff] 0.0
          %290 = vst [vmem:[#allocation2 + $0xe0] sm:$0xff] 0.0
          %291 = vst [vmem:[#allocation2 + $0xe8] sm:$0xff] 0.0
          %292 = vst [vmem:[#allocation2 + $0xf0] sm:$0xff] 0.0
          %293 = vst [vmem:[#allocation2 + $0xf8] sm:$0xff] 0.0
        $region44: #{tpu_custom_call.1} parent=31 // pred_fallthru
          _
        %v294 = vld [vmem:[#allocation2] sm:$0xff]
        %v295 = vld [vmem:[#allocation2 + $0x8] sm:$0xff]
        %v296 = vld [vmem:[#allocation2 + $0x10] sm:$0xff]
        %v297 = vld [vmem:[#allocation2 + $0x18] sm:$0xff]
        %v298 = vld [vmem:[#allocation2 + $0x20] sm:$0xff]
        %v299 = vld [vmem:[#allocation2 + $0x28] sm:$0xff]
        %v300 = vld [vmem:[#allocation2 + $0x30] sm:$0xff]
        %v301 = vld [vmem:[#allocation2 + $0x38] sm:$0xff]
        %v302 = vld [vmem:[#allocation2 + $0x40] sm:$0xff]
        %v303 = vld [vmem:[#allocation2 + $0x48] sm:$0xff]
        %v304 = vld [vmem:[#allocation2 + $0x50] sm:$0xff]
        %v305 = vld [vmem:[#allocation2 + $0x58] sm:$0xff]
        %v306 = vld [vmem:[#allocation2 + $0x60] sm:$0xff]
        %v307 = vld [vmem:[#allocation2 + $0x68] sm:$0xff]
        %v308 = vld [vmem:[#allocation2 + $0x70] sm:$0xff]
        %v309 = vld [vmem:[#allocation2 + $0x78] sm:$0xff]
        %v310 = vld [vmem:[#allocation2 + $0x80] sm:$0xff]
        %v311 = vld [vmem:[#allocation2 + $0x88] sm:$0xff]
        %v312 = vld [vmem:[#allocation2 + $0x90] sm:$0xff]
        %v313 = vld [vmem:[#allocation2 + $0x98] sm:$0xff]
        %v314 = vld [vmem:[#allocation2 + $0xa0] sm:$0xff]
        %v315 = vld [vmem:[#allocation2 + $0xa8] sm:$0xff]
        %v316 = vld [vmem:[#allocation2 + $0xb0] sm:$0xff]
        %v317 = vld [vmem:[#allocation2 + $0xb8] sm:$0xff]
        %v318 = vld [vmem:[#allocation2 + $0xc0] sm:$0xff]
        %v319 = vld [vmem:[#allocation2 + $0xc8] sm:$0xff]
        %v320 = vld [vmem:[#allocation2 + $0xd0] sm:$0xff]
        %v321 = vld [vmem:[#allocation2 + $0xd8] sm:$0xff]
        %v322 = vld [vmem:[#allocation2 + $0xe0] sm:$0xff]
        %v323 = vld [vmem:[#allocation2 + $0xe8] sm:$0xff]
        %v324 = vld [vmem:[#allocation2 + $0xf0] sm:$0xff]
        %v325 = vld [vmem:[#allocation2 + $0xf8] sm:$0xff]
        %v326 = vld [vmem:[#allocation3] sm:$0xf]
        %v327 = vld [vmem:[#allocation3 + $0x4] sm:$0xf]
        %v328 = vld [vmem:[#allocation3 + $0x8] sm:$0xf]
        %v329 = vld [vmem:[#allocation3 + $0xc] sm:$0xf]
        %v330 = vld [vmem:[#allocation3 + $0x10] sm:$0xf]
        %v331 = vld [vmem:[#allocation3 + $0x14] sm:$0xf]
        %v332 = vld [vmem:[#allocation3 + $0x18] sm:$0xf]
        %v333 = vld [vmem:[#allocation3 + $0x1c] sm:$0xf]
        %v334 = vld [vmem:[#allocation3 + $0x20] sm:$0xf]
        %v335 = vld [vmem:[#allocation3 + $0x24] sm:$0xf]
        %v336 = vld [vmem:[#allocation3 + $0x28] sm:$0xf]
        %v337 = vld [vmem:[#allocation3 + $0x2c] sm:$0xf]
        %v338 = vld [vmem:[#allocation3 + $0x30] sm:$0xf]
        %v339 = vld [vmem:[#allocation3 + $0x34] sm:$0xf]
        %v340 = vld [vmem:[#allocation3 + $0x38] sm:$0xf]
        %v341 = vld [vmem:[#allocation3 + $0x3c] sm:$0xf]
        %v342 = vld [vmem:[#allocation3 + $0x40] sm:$0xf]
        %v343 = vld [vmem:[#allocation3 + $0x44] sm:$0xf]
        %v344 = vld [vmem:[#allocation3 + $0x48] sm:$0xf]
        %v345 = vld [vmem:[#allocation3 + $0x4c] sm:$0xf]
        %v346 = vld [vmem:[#allocation3 + $0x50] sm:$0xf]
        %v347 = vld [vmem:[#allocation3 + $0x54] sm:$0xf]
        %v348 = vld [vmem:[#allocation3 + $0x58] sm:$0xf]
        %v349 = vld [vmem:[#allocation3 + $0x5c] sm:$0xf]
        %v350 = vld [vmem:[#allocation3 + $0x60] sm:$0xf]
        %v351 = vld [vmem:[#allocation3 + $0x64] sm:$0xf]
        %v352 = vld [vmem:[#allocation3 + $0x68] sm:$0xf]
        %v353 = vld [vmem:[#allocation3 + $0x6c] sm:$0xf]
        %v354 = vld [vmem:[#allocation3 + $0x70] sm:$0xf]
        %v355 = vld [vmem:[#allocation3 + $0x74] sm:$0xf]
        %v356 = vld [vmem:[#allocation3 + $0x78] sm:$0xf]
        %v357 = vld [vmem:[#allocation3 + $0x7c] sm:$0xf]
        %v358 = vld [vmem:[%s225] sm:$0xf]
        %v359 = vld [vmem:[%s225 + $0x4] sm:$0xf]
        %v360 = vld [vmem:[%s225 + $0x8] sm:$0xf]
        %v361 = vld [vmem:[%s225 + $0xc] sm:$0xf]
        %v362 = vld [vmem:[%s225 + $0x10] sm:$0xf]
        %v363 = vld [vmem:[%s225 + $0x14] sm:$0xf]
        %v364 = vld [vmem:[%s225 + $0x18] sm:$0xf]
        %v365 = vld [vmem:[%s225 + $0x1c] sm:$0xf]
        %v366 = vld [vmem:[%s225 + $0x20] sm:$0xf]
        %v367 = vld [vmem:[%s225 + $0x24] sm:$0xf]
        %v368 = vld [vmem:[%s225 + $0x28] sm:$0xf]
        %v369 = vld [vmem:[%s225 + $0x2c] sm:$0xf]
        %v370 = vld [vmem:[%s225 + $0x30] sm:$0xf]
        %v371 = vld [vmem:[%s225 + $0x34] sm:$0xf]
        %v372 = vld [vmem:[%s225 + $0x38] sm:$0xf]
        %v373 = vld [vmem:[%s225 + $0x3c] sm:$0xf]
        %v406 = vunpack.c.l.b16 %v326
        %v407 = vunpack.c.l.b16 %v327
        %v408 = vunpack.c.l.b16 %v328
        %v409 = vunpack.c.l.b16 %v329
        %v410 = vunpack.c.l.b16 %v330
        %v411 = vunpack.c.l.b16 %v331
        %v412 = vunpack.c.l.b16 %v332
        %v413 = vunpack.c.l.b16 %v333
        %v414 = vunpack.c.l.b16 %v334
        %v415 = vunpack.c.l.b16 %v335
        %v416 = vunpack.c.l.b16 %v336
        %v417 = vunpack.c.l.b16 %v337
        %v418 = vunpack.c.l.b16 %v338
        %v419 = vunpack.c.l.b16 %v339
        %v420 = vunpack.c.l.b16 %v340
        %v421 = vunpack.c.l.b16 %v341
        %v422 = vunpack.c.l.b16 %v342
        %v423 = vunpack.c.l.b16 %v343
        %v424 = vunpack.c.l.b16 %v344
        %v425 = vunpack.c.l.b16 %v345
        %v426 = vunpack.c.l.b16 %v346
        %v427 = vunpack.c.l.b16 %v347
        %v428 = vunpack.c.l.b16 %v348
        %v429 = vunpack.c.l.b16 %v349
        %v430 = vunpack.c.l.b16 %v350
        %v431 = vunpack.c.l.b16 %v351
        %v432 = vunpack.c.l.b16 %v352
        %v433 = vunpack.c.l.b16 %v353
        %v434 = vunpack.c.l.b16 %v354
        %v435 = vunpack.c.l.b16 %v355
        %v436 = vunpack.c.l.b16 %v356
        %v437 = vunpack.c.l.b16 %v357
        %v438 = vpack.c.b16 %v407, %v406
        %v439 = vpack.c.b16 %v409, %v408
        %v440 = vpack.c.b16 %v411, %v410
        %v441 = vpack.c.b16 %v413, %v412
        %v442 = vpack.c.b16 %v415, %v414
        %v443 = vpack.c.b16 %v417, %v416
        %v444 = vpack.c.b16 %v419, %v418
        %v445 = vpack.c.b16 %v421, %v420
        %v446 = vpack.c.b16 %v423, %v422
        %v447 = vpack.c.b16 %v425, %v424
        %v448 = vpack.c.b16 %v427, %v426
        %v449 = vpack.c.b16 %v429, %v428
        %v450 = vpack.c.b16 %v431, %v430
        %v451 = vpack.c.b16 %v433, %v432
        %v452 = vpack.c.b16 %v435, %v434
        %v453 = vpack.c.b16 %v437, %v436
        %v486 = vunpack.c.l.b16 %v358
        %v487 = vunpack.c.l.b16 %v359
        %v488 = vunpack.c.l.b16 %v360
        %v489 = vunpack.c.l.b16 %v361
        %v490 = vunpack.c.l.b16 %v362
        %v491 = vunpack.c.l.b16 %v363
        %v492 = vunpack.c.l.b16 %v364
        %v493 = vunpack.c.l.b16 %v365
        %v494 = vunpack.c.l.b16 %v366
        %v495 = vunpack.c.l.b16 %v367
        %v496 = vunpack.c.l.b16 %v368
        %v497 = vunpack.c.l.b16 %v369
        %v498 = vunpack.c.l.b16 %v370
        %v499 = vunpack.c.l.b16 %v371
        %v500 = vunpack.c.l.b16 %v372
        %v501 = vunpack.c.l.b16 %v373
        %v502 = vpack.c.b16 %v487, %v486
        %v503 = vpack.c.b16 %v489, %v488
        %v504 = vpack.c.b16 %v491, %v490
        %v505 = vpack.c.b16 %v493, %v492
        %v506 = vpack.c.b16 %v495, %v494
        %v507 = vpack.c.b16 %v497, %v496
        %v508 = vpack.c.b16 %v499, %v498
        %v509 = vpack.c.b16 %v501, %v500
        %518 = vmatprep.subr.bf16.mxu0 0
        %519 = vmatpush1.bf16.msra.mxu0 %v509
        %520 = vmatprep.subr.bf16.mxu0 0
        %521 = vmatpush1.bf16.msra.mxu0 %v508
        %522 = vmatprep.subr.bf16.mxu0 0
        %523 = vmatpush1.bf16.msra.mxu0 %v507
        %524 = vmatprep.subr.bf16.mxu0 0
        %525 = vmatpush1.bf16.msra.mxu0 %v506
        %526 = vmatprep.subr.bf16.mxu0 0
        %527 = vmatpush1.bf16.msra.mxu0 %v505
        %528 = vmatprep.subr.bf16.mxu0 0
        %529 = vmatpush1.bf16.msra.mxu0 %v504
        %530 = vmatprep.subr.bf16.mxu0 0
        %531 = vmatpush1.bf16.msra.mxu0 %v503
        %532 = vmatprep.subr.bf16.mxu0 0
        %533 = vmatpush1.bf16.msra.mxu0 %v502
        %534 = vmatprep.subr.bf16.mxu0 0
        %535 = vmatpush2.bf16.msra.mxu0 0
        %536 = vmatprep.subr.bf16.mxu0 0
        %537 = vmatpush2.bf16.msra.mxu0 0
        %538 = vmatprep.subr.bf16.mxu0 0
        %539 = vmatpush2.bf16.msra.mxu0 0
        %540 = vmatprep.subr.bf16.mxu0 0
        %541 = vmatpush2.bf16.msra.mxu0 0
        %542 = vmatprep.subr.bf16.mxu0 0
        %543 = vmatpush2.bf16.msra.mxu0 0
        %544 = vmatprep.subr.bf16.mxu0 0
        %545 = vmatpush2.bf16.msra.mxu0 0
        %546 = vmatprep.subr.bf16.mxu0 0
        %547 = vmatpush2.bf16.msra.mxu0 0
        %548 = vmatprep.subr.bf16.mxu0 0
        %549 = vmatpush2.bf16.msra.mxu0 0
        %550 = vmatprep.mubr.bf16.mxu0 0
        %551 = vmatmul.mubr.bf16.gmra.mxu0 %v438
        %v552 = vpop.f32.mrf.mxu0
        %v553 = vadd.f32 0.0, %v552
        %v554 = vpop.f32.mrf.mxu0
        %v555 = vpop.f32.mrf.mxu0
        %v556 = vadd.f32 0.0, %v555
        %v557 = vpop.f32.mrf.mxu0
        %558 = vmatprep.mubr.bf16.mxu0 0
        %559 = vmatmul.mubr.bf16.gmra.mxu0 %v439
        %v560 = vpop.f32.mrf.mxu0
        %v561 = vadd.f32 0.0, %v560
        %v562 = vpop.f32.mrf.mxu0
        %v563 = vpop.f32.mrf.mxu0
        %v564 = vadd.f32 0.0, %v563
        %v565 = vpop.f32.mrf.mxu0
        %566 = vmatprep.mubr.bf16.mxu0 0
        %567 = vmatmul.mubr.bf16.gmra.mxu0 %v440
        %v568 = vpop.f32.mrf.mxu0
        %v569 = vadd.f32 0.0, %v568
        %v570 = vpop.f32.mrf.mxu0
        %v571 = vpop.f32.mrf.mxu0
        %v572 = vadd.f32 0.0, %v571
        %v573 = vpop.f32.mrf.mxu0
        %574 = vmatprep.mubr.bf16.mxu0 0
        %575 = vmatmul.mubr.bf16.gmra.mxu0 %v441
        %v576 = vpop.f32.mrf.mxu0
        %v577 = vadd.f32 0.0, %v576
        %v578 = vpop.f32.mrf.mxu0
        %v579 = vpop.f32.mrf.mxu0
        %v580 = vadd.f32 0.0, %v579
        %v581 = vpop.f32.mrf.mxu0
        %582 = vmatprep.mubr.bf16.mxu0 0
        %583 = vmatmul.mubr.bf16.gmra.mxu0 %v442
        %v584 = vpop.f32.mrf.mxu0
        %v585 = vadd.f32 0.0, %v584
        %v586 = vpop.f32.mrf.mxu0
        %v587 = vpop.f32.mrf.mxu0
        %v588 = vadd.f32 0.0, %v587
        %v589 = vpop.f32.mrf.mxu0
        %590 = vmatprep.mubr.bf16.mxu0 0
        %591 = vmatmul.mubr.bf16.gmra.mxu0 %v443
        %v592 = vpop.f32.mrf.mxu0
        %v593 = vadd.f32 0.0, %v592
        %v594 = vpop.f32.mrf.mxu0
        %v595 = vpop.f32.mrf.mxu0
        %v596 = vadd.f32 0.0, %v595
        %v597 = vpop.f32.mrf.mxu0
        %598 = vmatprep.mubr.bf16.mxu0 0
        %599 = vmatmul.mubr.bf16.gmra.mxu0 %v444
        %v600 = vpop.f32.mrf.mxu0
        %v601 = vadd.f32 0.0, %v600
        %v602 = vpop.f32.mrf.mxu0
        %v603 = vpop.f32.mrf.mxu0
        %v604 = vadd.f32 0.0, %v603
        %v605 = vpop.f32.mrf.mxu0
        %606 = vmatprep.mubr.bf16.mxu0 0
        %607 = vmatmul.mubr.bf16.gmra.mxu0 %v445
        %v608 = vpop.f32.mrf.mxu0
        %v609 = vadd.f32 0.0, %v608
        %v610 = vpop.f32.mrf.mxu0
        %v611 = vpop.f32.mrf.mxu0
        %v612 = vadd.f32 0.0, %v611
        %v613 = vpop.f32.mrf.mxu0
        %614 = vmatprep.mubr.bf16.mxu0 0
        %615 = vmatmul.mubr.bf16.gmra.mxu0 %v446
        %v616 = vpop.f32.mrf.mxu0
        %v617 = vadd.f32 0.0, %v616
        %v618 = vpop.f32.mrf.mxu0
        %v619 = vpop.f32.mrf.mxu0
        %v620 = vadd.f32 0.0, %v619
        %v621 = vpop.f32.mrf.mxu0
        %622 = vmatprep.mubr.bf16.mxu0 0
        %623 = vmatmul.mubr.bf16.gmra.mxu0 %v447
        %v624 = vpop.f32.mrf.mxu0
        %v625 = vadd.f32 0.0, %v624
        %v626 = vpop.f32.mrf.mxu0
        %v627 = vpop.f32.mrf.mxu0
        %v628 = vadd.f32 0.0, %v627
        %v629 = vpop.f32.mrf.mxu0
        %630 = vmatprep.mubr.bf16.mxu0 0
        %631 = vmatmul.mubr.bf16.gmra.mxu0 %v448
        %v632 = vpop.f32.mrf.mxu0
        %v633 = vadd.f32 0.0, %v632
        %v634 = vpop.f32.mrf.mxu0
        %v635 = vpop.f32.mrf.mxu0
        %v636 = vadd.f32 0.0, %v635
        %v637 = vpop.f32.mrf.mxu0
        %638 = vmatprep.mubr.bf16.mxu0 0
        %639 = vmatmul.mubr.bf16.gmra.mxu0 %v449
        %v640 = vpop.f32.mrf.mxu0
        %v641 = vadd.f32 0.0, %v640
        %v642 = vpop.f32.mrf.mxu0
        %v643 = vpop.f32.mrf.mxu0
        %v644 = vadd.f32 0.0, %v643
        %v645 = vpop.f32.mrf.mxu0
        %646 = vmatprep.mubr.bf16.mxu0 0
        %647 = vmatmul.mubr.bf16.gmra.mxu0 %v450
        %v648 = vpop.f32.mrf.mxu0
        %v649 = vadd.f32 0.0, %v648
        %v650 = vpop.f32.mrf.mxu0
        %v651 = vpop.f32.mrf.mxu0
        %v652 = vadd.f32 0.0, %v651
        %v653 = vpop.f32.mrf.mxu0
        %654 = vmatprep.mubr.bf16.mxu0 0
        %655 = vmatmul.mubr.bf16.gmra.mxu0 %v451
        %v656 = vpop.f32.mrf.mxu0
        %v657 = vadd.f32 0.0, %v656
        %v658 = vpop.f32.mrf.mxu0
        %v659 = vpop.f32.mrf.mxu0
        %v660 = vadd.f32 0.0, %v659
        %v661 = vpop.f32.mrf.mxu0
        %662 = vmatprep.mubr.bf16.mxu0 0
        %663 = vmatmul.mubr.bf16.gmra.mxu0 %v452
        %v664 = vpop.f32.mrf.mxu0
        %v665 = vadd.f32 0.0, %v664
        %v666 = vpop.f32.mrf.mxu0
        %v667 = vpop.f32.mrf.mxu0
        %v668 = vadd.f32 0.0, %v667
        %v669 = vpop.f32.mrf.mxu0
        %670 = vmatprep.mubr.bf16.mxu0 0
        %671 = vmatmul.mubr.bf16.gmra.mxu0 %v453
        %v672 = vpop.f32.mrf.mxu0
        %v673 = vadd.f32 0.0, %v672
        %v674 = vpop.f32.mrf.mxu0
        %v675 = vpop.f32.mrf.mxu0
        %v676 = vadd.f32 0.0, %v675
        %v677 = vpop.f32.mrf.mxu0
        %678 = vdwg.mxu0
        %v679 = vadd.f32 %v294, %v553
        %v680 = vadd.f32 %v295, %v556
        %v681 = vadd.f32 %v296, %v561
        %v682 = vadd.f32 %v297, %v564
        %v683 = vadd.f32 %v298, %v569
        %v684 = vadd.f32 %v299, %v572
        %v685 = vadd.f32 %v300, %v577
        %v686 = vadd.f32 %v301, %v580
        %v687 = vadd.f32 %v302, %v585
        %v688 = vadd.f32 %v303, %v588
        %v689 = vadd.f32 %v304, %v593
        %v690 = vadd.f32 %v305, %v596
        %v691 = vadd.f32 %v306, %v601
        %v692 = vadd.f32 %v307, %v604
        %v693 = vadd.f32 %v308, %v609
        %v694 = vadd.f32 %v309, %v612
        %v695 = vadd.f32 %v310, %v617
        %v696 = vadd.f32 %v311, %v620
        %v697 = vadd.f32 %v312, %v625
        %v698 = vadd.f32 %v313, %v628
        %v699 = vadd.f32 %v314, %v633
        %v700 = vadd.f32 %v315, %v636
        %v701 = vadd.f32 %v316, %v641
        %v702 = vadd.f32 %v317, %v644
        %v703 = vadd.f32 %v318, %v649
        %v704 = vadd.f32 %v319, %v652
        %v705 = vadd.f32 %v320, %v657
        %v706 = vadd.f32 %v321, %v660
        %v707 = vadd.f32 %v322, %v665
        %v708 = vadd.f32 %v323, %v668
        %v709 = vadd.f32 %v324, %v673
        %v710 = vadd.f32 %v325, %v676
        %711 = vst [vmem:[#allocation2] sm:$0xff] %v679
        %712 = vst [vmem:[#allocation2 + $0x8] sm:$0xff] %v680
        %713 = vst [vmem:[#allocation2 + $0x10] sm:$0xff] %v681
        %714 = vst [vmem:[#allocation2 + $0x18] sm:$0xff] %v682
        %715 = vst [vmem:[#allocation2 + $0x20] sm:$0xff] %v683
        %716 = vst [vmem:[#allocation2 + $0x28] sm:$0xff] %v684
        %717 = vst [vmem:[#allocation2 + $0x30] sm:$0xff] %v685
        %718 = vst [vmem:[#allocation2 + $0x38] sm:$0xff] %v686
        %719 = vst [vmem:[#allocation2 + $0x40] sm:$0xff] %v687
        %720 = vst [vmem:[#allocation2 + $0x48] sm:$0xff] %v688
        %721 = vst [vmem:[#allocation2 + $0x50] sm:$0xff] %v689
        %722 = vst [vmem:[#allocation2 + $0x58] sm:$0xff] %v690
        %723 = vst [vmem:[#allocation2 + $0x60] sm:$0xff] %v691
        %724 = vst [vmem:[#allocation2 + $0x68] sm:$0xff] %v692
        %725 = vst [vmem:[#allocation2 + $0x70] sm:$0xff] %v693
        %726 = vst [vmem:[#allocation2 + $0x78] sm:$0xff] %v694
        %727 = vst [vmem:[#allocation2 + $0x80] sm:$0xff] %v695
        %728 = vst [vmem:[#allocation2 + $0x88] sm:$0xff] %v696
        %729 = vst [vmem:[#allocation2 + $0x90] sm:$0xff] %v697
        %730 = vst [vmem:[#allocation2 + $0x98] sm:$0xff] %v698
        %731 = vst [vmem:[#allocation2 + $0xa0] sm:$0xff] %v699
        %732 = vst [vmem:[#allocation2 + $0xa8] sm:$0xff] %v700
        %733 = vst [vmem:[#allocation2 + $0xb0] sm:$0xff] %v701
        %734 = vst [vmem:[#allocation2 + $0xb8] sm:$0xff] %v702
        %735 = vst [vmem:[#allocation2 + $0xc0] sm:$0xff] %v703
        %736 = vst [vmem:[#allocation2 + $0xc8] sm:$0xff] %v704
        %737 = vst [vmem:[#allocation2 + $0xd0] sm:$0xff] %v705
        %738 = vst [vmem:[#allocation2 + $0xd8] sm:$0xff] %v706
        %739 = vst [vmem:[#allocation2 + $0xe0] sm:$0xff] %v707
        %740 = vst [vmem:[#allocation2 + $0xe8] sm:$0xff] %v708
        %741 = vst [vmem:[#allocation2 + $0xf0] sm:$0xff] %v709
        %742 = vst [vmem:[#allocation2 + $0xf8] sm:$0xff] %v710
        // Predicated region
        $region45: #{tpu_custom_call.1} parent=31 // pred_check
          %p743 = pneg %p258
        $region46: #{tpu_custom_call.1} parent=31 // pred_check_branch
          %745 = sbr.rel (%p743) target = $region48
        $region47: #{tpu_custom_call.1} parent=31 // pred_region
          %v746 = vld [vmem:[#allocation2] sm:$0xff]
          %v747 = vld [vmem:[#allocation2 + $0x8] sm:$0xff]
          %v748 = vld [vmem:[#allocation2 + $0x10] sm:$0xff]
          %v749 = vld [vmem:[#allocation2 + $0x18] sm:$0xff]
          %v750 = vld [vmem:[#allocation2 + $0x20] sm:$0xff]
          %v751 = vld [vmem:[#allocation2 + $0x28] sm:$0xff]
          %v752 = vld [vmem:[#allocation2 + $0x30] sm:$0xff]
          %v753 = vld [vmem:[#allocation2 + $0x38] sm:$0xff]
          %v754 = vld [vmem:[#allocation2 + $0x40] sm:$0xff]
          %v755 = vld [vmem:[#allocation2 + $0x48] sm:$0xff]
          %v756 = vld [vmem:[#allocation2 + $0x50] sm:$0xff]
          %v757 = vld [vmem:[#allocation2 + $0x58] sm:$0xff]
          %v758 = vld [vmem:[#allocation2 + $0x60] sm:$0xff]
          %v759 = vld [vmem:[#allocation2 + $0x68] sm:$0xff]
          %v760 = vld [vmem:[#allocation2 + $0x70] sm:$0xff]
          %v761 = vld [vmem:[#allocation2 + $0x78] sm:$0xff]
          %v762 = vld [vmem:[#allocation2 + $0x80] sm:$0xff]
          %v763 = vld [vmem:[#allocation2 + $0x88] sm:$0xff]
          %v764 = vld [vmem:[#allocation2 + $0x90] sm:$0xff]
          %v765 = vld [vmem:[#allocation2 + $0x98] sm:$0xff]
          %v766 = vld [vmem:[#allocation2 + $0xa0] sm:$0xff]
          %v767 = vld [vmem:[#allocation2 + $0xa8] sm:$0xff]
          %v768 = vld [vmem:[#allocation2 + $0xb0] sm:$0xff]
          %v769 = vld [vmem:[#allocation2 + $0xb8] sm:$0xff]
          %v770 = vld [vmem:[#allocation2 + $0xc0] sm:$0xff]
          %v771 = vld [vmem:[#allocation2 + $0xc8] sm:$0xff]
          %v772 = vld [vmem:[#allocation2 + $0xd0] sm:$0xff]
          %v773 = vld [vmem:[#allocation2 + $0xd8] sm:$0xff]
          %v774 = vld [vmem:[#allocation2 + $0xe0] sm:$0xff]
          %v775 = vld [vmem:[#allocation2 + $0xe8] sm:$0xff]
          %v776 = vld [vmem:[#allocation2 + $0xf0] sm:$0xff]
          %v777 = vld [vmem:[#allocation2 + $0xf8] sm:$0xff]
          %v778 = vld [vmem:[%s255] sm:$0x1]
          %v780 = vlaneseq
          %v781 = vshrl.u32 %v780, 7
          %v782 = vsub.s32 0, %v781
          %v783 = vrot.slane %v778, %v782
          %v785 = vadd.f32 %v746, %v783
          %v786 = vadd.f32 %v747, %v783
          %v787 = vadd.f32 %v748, %v783
          %v788 = vadd.f32 %v749, %v783
          %v789 = vadd.f32 %v750, %v783
          %v790 = vadd.f32 %v751, %v783
          %v791 = vadd.f32 %v752, %v783
          %v792 = vadd.f32 %v753, %v783
          %v793 = vadd.f32 %v754, %v783
          %v794 = vadd.f32 %v755, %v783
          %v795 = vadd.f32 %v756, %v783
          %v796 = vadd.f32 %v757, %v783
          %v797 = vadd.f32 %v758, %v783
          %v798 = vadd.f32 %v759, %v783
          %v799 = vadd.f32 %v760, %v783
          %v800 = vadd.f32 %v761, %v783
          %v801 = vadd.f32 %v762, %v783
          %v802 = vadd.f32 %v763, %v783
          %v803 = vadd.f32 %v764, %v783
          %v804 = vadd.f32 %v765, %v783
          %v805 = vadd.f32 %v766, %v783
          %v806 = vadd.f32 %v767, %v783
          %v807 = vadd.f32 %v768, %v783
          %v808 = vadd.f32 %v769, %v783
          %v809 = vadd.f32 %v770, %v783
          %v810 = vadd.f32 %v771, %v783
          %v811 = vadd.f32 %v772, %v783
          %v812 = vadd.f32 %v773, %v783
          %v813 = vadd.f32 %v774, %v783
          %v814 = vadd.f32 %v775, %v783
          %v815 = vadd.f32 %v776, %v783
          %v816 = vadd.f32 %v777, %v783
          %v817 = vpack.c.bf16 %v786, %v785
          %v818 = vpack.c.bf16 %v788, %v787
          %v819 = vpack.c.bf16 %v790, %v789
          %v820 = vpack.c.bf16 %v792, %v791
          %v821 = vpack.c.bf16 %v794, %v793
          %v822 = vpack.c.bf16 %v796, %v795
          %v823 = vpack.c.bf16 %v798, %v797
          %v824 = vpack.c.bf16 %v800, %v799
          %v825 = vpack.c.bf16 %v802, %v801
          %v826 = vpack.c.bf16 %v804, %v803
          %v827 = vpack.c.bf16 %v806, %v805
          %v828 = vpack.c.bf16 %v808, %v807
          %v829 = vpack.c.bf16 %v810, %v809
          %v830 = vpack.c.bf16 %v812, %v811
          %v831 = vpack.c.bf16 %v814, %v813
          %v832 = vpack.c.bf16 %v816, %v815
          %v849 = vunpack.c.l.b16 %v817
          %v850 = vunpack.c.h.b16 %v817
          %v851 = vunpack.c.l.b16 %v818
          %v852 = vunpack.c.h.b16 %v818
          %v853 = vunpack.c.l.b16 %v819
          %v854 = vunpack.c.h.b16 %v819
          %v855 = vunpack.c.l.b16 %v820
          %v856 = vunpack.c.h.b16 %v820
          %v857 = vunpack.c.l.b16 %v821
          %v858 = vunpack.c.h.b16 %v821
          %v859 = vunpack.c.l.b16 %v822
          %v860 = vunpack.c.h.b16 %v822
          %v861 = vunpack.c.l.b16 %v823
          %v862 = vunpack.c.h.b16 %v823
          %v863 = vunpack.c.l.b16 %v824
          %v864 = vunpack.c.h.b16 %v824
          %v865 = vunpack.c.l.b16 %v825
          %v866 = vunpack.c.h.b16 %v825
          %v867 = vunpack.c.l.b16 %v826
          %v868 = vunpack.c.h.b16 %v826
          %v869 = vunpack.c.l.b16 %v827
          %v870 = vunpack.c.h.b16 %v827
          %v871 = vunpack.c.l.b16 %v828
          %v872 = vunpack.c.h.b16 %v828
          %v873 = vunpack.c.l.b16 %v829
          %v874 = vunpack.c.h.b16 %v829
          %v875 = vunpack.c.l.b16 %v830
          %v876 = vunpack.c.h.b16 %v830
          %v877 = vunpack.c.l.b16 %v831
          %v878 = vunpack.c.h.b16 %v831
          %v879 = vunpack.c.l.b16 %v832
          %v880 = vunpack.c.h.b16 %v832
          %v881 = vpack.c.b16 %v849, %v849
          %v882 = vpack.c.b16 %v850, %v850
          %v883 = vpack.c.b16 %v851, %v851
          %v884 = vpack.c.b16 %v852, %v852
          %v885 = vpack.c.b16 %v853, %v853
          %v886 = vpack.c.b16 %v854, %v854
          %v887 = vpack.c.b16 %v855, %v855
          %v888 = vpack.c.b16 %v856, %v856
          %v889 = vpack.c.b16 %v857, %v857
          %v890 = vpack.c.b16 %v858, %v858
          %v891 = vpack.c.b16 %v859, %v859
          %v892 = vpack.c.b16 %v860, %v860
          %v893 = vpack.c.b16 %v861, %v861
          %v894 = vpack.c.b16 %v862, %v862
          %v895 = vpack.c.b16 %v863, %v863
          %v896 = vpack.c.b16 %v864, %v864
          %v897 = vpack.c.b16 %v865, %v865
          %v898 = vpack.c.b16 %v866, %v866
          %v899 = vpack.c.b16 %v867, %v867
          %v900 = vpack.c.b16 %v868, %v868
          %v901 = vpack.c.b16 %v869, %v869
          %v902 = vpack.c.b16 %v870, %v870
          %v903 = vpack.c.b16 %v871, %v871
          %v904 = vpack.c.b16 %v872, %v872
          %v905 = vpack.c.b16 %v873, %v873
          %v906 = vpack.c.b16 %v874, %v874
          %v907 = vpack.c.b16 %v875, %v875
          %v908 = vpack.c.b16 %v876, %v876
          %v909 = vpack.c.b16 %v877, %v877
          %v910 = vpack.c.b16 %v878, %v878
          %v911 = vpack.c.b16 %v879, %v879
          %v912 = vpack.c.b16 %v880, %v880
          %945 = vst [vmem:[%s250] sm:$0xf] %v881
          %946 = vst [vmem:[%s250 + $0x4] sm:$0xf] %v882
          %947 = vst [vmem:[%s250 + $0x8] sm:$0xf] %v883
          %948 = vst [vmem:[%s250 + $0xc] sm:$0xf] %v884
          %949 = vst [vmem:[%s250 + $0x10] sm:$0xf] %v885
          %950 = vst [vmem:[%s250 + $0x14] sm:$0xf] %v886
          %951 = vst [vmem:[%s250 + $0x18] sm:$0xf] %v887
          %952 = vst [vmem:[%s250 + $0x1c] sm:$0xf] %v888
          %953 = vst [vmem:[%s250 + $0x20] sm:$0xf] %v889
          %954 = vst [vmem:[%s250 + $0x24] sm:$0xf] %v890
          %955 = vst [vmem:[%s250 + $0x28] sm:$0xf] %v891
          %956 = vst [vmem:[%s250 + $0x2c] sm:$0xf] %v892
          %957 = vst [vmem:[%s250 + $0x30] sm:$0xf] %v893
          %958 = vst [vmem:[%s250 + $0x34] sm:$0xf] %v894
          %959 = vst [vmem:[%s250 + $0x38] sm:$0xf] %v895
          %960 = vst [vmem:[%s250 + $0x3c] sm:$0xf] %v896
          %961 = vst [vmem:[%s250 + $0x40] sm:$0xf] %v897
          %962 = vst [vmem:[%s250 + $0x44] sm:$0xf] %v898
          %963 = vst [vmem:[%s250 + $0x48] sm:$0xf] %v899
          %964 = vst [vmem:[%s250 + $0x4c] sm:$0xf] %v900
          %965 = vst [vmem:[%s250 + $0x50] sm:$0xf] %v901
          %966 = vst [vmem:[%s250 + $0x54] sm:$0xf] %v902
          %967 = vst [vmem:[%s250 + $0x58] sm:$0xf] %v903
          %968 = vst [vmem:[%s250 + $0x5c] sm:$0xf] %v904
          %969 = vst [vmem:[%s250 + $0x60] sm:$0xf] %v905
          %970 = vst [vmem:[%s250 + $0x64] sm:$0xf] %v906
          %971 = vst [vmem:[%s250 + $0x68] sm:$0xf] %v907
          %972 = vst [vmem:[%s250 + $0x6c] sm:$0xf] %v908
          %973 = vst [vmem:[%s250 + $0x70] sm:$0xf] %v909
          %974 = vst [vmem:[%s250 + $0x74] sm:$0xf] %v910
          %975 = vst [vmem:[%s250 + $0x78] sm:$0xf] %v911
          %976 = vst [vmem:[%s250 + $0x7c] sm:$0xf] %v912
        $region48: #{tpu_custom_call.1} parent=31 // pred_fallthru
          _
        %s977 = sand.u32 %s132, 1
        %s978 = scalar_lea.sflag [#allocation5], %s977
        %s979 = sand.u32 %s132, 1
        %s980 = smul.addr %s979, 128
        %s981 = scalar_lea.vmem [#allocation8], %s980
        // Predicated region
        $region49: #{tpu_custom_call.1} parent=31 // pred_check
          %p982 = pneg %p142
        $region50: #{tpu_custom_call.1} parent=31 // pred_check_branch
          %984 = sbr.rel (%p982) target = $region52
        $region51: #{tpu_custom_call.1} parent=31 // pred_region
          %s985 = smul.u32 32, %s26
          %s987 = ssub.s32 2048, 2048
          %988 = vsyncadd %s978, %s987
          %s989 = smul.addr %s985, 3
          %s990 = sadd.s32 %s27, %s989
          %s991 = smul.addr %s990, 64
          %s992 = scalar_lea.hbm %s3, %s991
          %s993 = sshll.u32 %s981, 4
          %s994 = int_to_ptr.vmem [resolvable:$true] %s993
          %999 = dma.vmem_to_hbm [thread:$0]  %s994, 2048, %s992, %s978, 64, 192, 4
        $region52: #{tpu_custom_call.1} parent=31 // pred_fallthru
          _
      $region32: #{tpu_custom_call.1} parent=5 // pred_fallthru
        _
      %p1000 = scmp.le.s32.totalorder 2, %s16
      // Predicated region
      $region53: #{tpu_custom_call.1} parent=5 // pred_check
        %p1001 = pneg %p1000
      $region54: #{tpu_custom_call.1} parent=5 // pred_check_branch
        %1003 = sbr.rel (%p1001) target = $region56
      $region55: #{tpu_custom_call.1} parent=5 // pred_region
        %s1004 = ssub.s32 %s16, 2
        // Predicated region
        $region57: #{tpu_custom_call.1} parent=55 // pred_check
          %p1005 = pneg %p148
        $region58: #{tpu_custom_call.1} parent=55 // pred_check_branch
          %1007 = sbr.rel (%p1005) target = $region60
        $region59: #{tpu_custom_call.1} parent=55 // pred_region
          %s1008 = sand.u32 %s133, 1
          %s1009 = scalar_lea.sflag [#allocation5], %s1008
          %s1010 = sand.u32 %s133, 1
          %s1011 = smul.addr %s1010, 128
          %s1012 = scalar_lea.vmem [#allocation8], %s1011
          %1013 = dma.done %s1009, 2048
        $region60: #{tpu_custom_call.1} parent=55 // pred_fallthru
          _
      $region56: #{tpu_custom_call.1} parent=5 // pred_fallthru
        _
    $region6: #{tpu_custom_call.1} parent=1 // loop_footer
      %s20 = sadd.s32 1, %s16
    $region7: #{tpu_custom_call.1} parent=1 // loop_footer_branch
      %15 = sbr.rel target = $region3
    $region8: #{tpu_custom_call.1} parent=1 // loop_exit
      _
    %1014 = vsyncpa [#allocation4], 1
    %s1015 = scalar_lea.sflag [#allocation4], 1
    %1016 = vsyncpa %s1015, 1
    %1017 = vsyncpa [#allocation7], 1
    %s1018 = scalar_lea.sflag [#allocation7], 1
    %1019 = vsyncpa %s1018, 1
    %1020 = vsyncpa [#allocation5], 1
    %s1021 = scalar_lea.sflag [#allocation5], 1
    %1022 = vsyncpa %s1021, 1

</llo_original>
